<compile_context>
chip_gen: v6e
topology: v6e:2x2x1
jax: 0.10.0
libtpu: 0.0.40
codegen_flags: <defaults>
</compile_context>

<pallas_src>
import functools

import jax
import jax.numpy as jnp
from jax.experimental import pallas as pl
from jax.experimental.pallas import tpu as pltpu

LANE = 128  # TPU lane width; output columns padded to this for lane-dense stores


def _round_up(x, m):
    return ((x + m - 1) // m) * m


def _prep_eigenratio(eigenratio, outdim):
    er = jnp.asarray(eigenratio, jnp.float32)
    if er.ndim > 0:
        er = er.reshape(1, -1)
    return jnp.broadcast_to(er, (1, outdim))


# --------------------- fused forward + weighted MSE --------------------------
def _fused_fwd_loss_kernel(n_rows,
                           x_ref, w_ref, b_ref, yt_ref, er_ref,
                           y_ref, loss_ref, acc_ref):
    i = pl.program_id(0)
    tm = x_ref.shape[0]

    @pl.when(i == 0)
    def _init():
        acc_ref[0] = jnp.float32(0.0)

    # y = x @ W + b   (W/b zero-padded to LANE output columns -> lane-dense store)
    y_full = jnp.dot(x_ref[...], w_ref[...], preferred_element_type=jnp.float32)
    y_full = y_full + b_ref[...]          # (tm, LANE) + (1, LANE)
    y_ref[...] = y_full.astype(y_ref.dtype)

    # weighted squared error; eigenratio is zero on padded output columns, so
    # the full-lane multiply-reduce equals the sum over the real outdim columns.
    se = (y_full - yt_ref[...]) ** 2                            # MSELoss(reduction='none')
    wse = jnp.sum(se * er_ref[...], axis=1, keepdims=True)      # (* eigenratio).sum(axis=1)
    row = jax.lax.broadcasted_iota(jnp.int32, (tm, 1), 0) + i * tm
    wse = jnp.where(row < n_rows, wse, 0.0)                     # mask batch padding
    acc_ref[0] += jnp.sum(wse)

    @pl.when(i == pl.num_programs(0) - 1)
    def _finalize():
        loss_ref[0, 0] = acc_ref[0] / jnp.float32(n_rows)       # .mean() over global N


def mlp_forward_with_loss(x, w, b, y_true, eigenratio, *, tm=512):
    """Returns (y_pred [N, outdim], weighted_loss scalar) in one fused kernel."""
    n, indim = x.shape
    outdim = w.shape[1]
    outp = _round_up(outdim, LANE)

    tm = min(tm, _round_up(n, 8))
    n_pad = _round_up(n, tm)

    x_p = jnp.pad(x.astype(jnp.float32), ((0, n_pad - n), (0, 0)))
    yt_p = jnp.pad(y_true.astype(jnp.float32),
                   ((0, n_pad - n), (0, outp - outdim)))
    w_p = jnp.pad(w.astype(jnp.float32), ((0, 0), (0, outp - outdim)))
    b_p = jnp.pad(jnp.asarray(b, jnp.float32).reshape(1, outdim),
                  ((0, 0), (0, outp - outdim)))
    er_p = jnp.pad(_prep_eigenratio(eigenratio, outdim),
                   ((0, 0), (0, outp - outdim)))                 # zeros on pad cols

    kernel = functools.partial(_fused_fwd_loss_kernel, n)
    y_pad, loss = pl.pallas_call(
        kernel,
        out_shape=(jax.ShapeDtypeStruct((n_pad, outp), jnp.float32),
                   jax.ShapeDtypeStruct((1, 1), jnp.float32)),
        grid=(n_pad // tm,),
        in_specs=[
            pl.BlockSpec((tm, indim), lambda i: (i, 0)),
            pl.BlockSpec((indim, outp), lambda i: (0, 0)),
            pl.BlockSpec((1, outp), lambda i: (0, 0)),
            pl.BlockSpec((tm, outp), lambda i: (i, 0)),
            pl.BlockSpec((1, outp), lambda i: (0, 0)),
        ],
        out_specs=(
            pl.BlockSpec((tm, outp), lambda i: (i, 0)),
            pl.BlockSpec(memory_space=pltpu.MemorySpace.SMEM),
        ),
        scratch_shapes=[pltpu.SMEM((1,), jnp.float32)],
        compiler_params=pltpu.CompilerParams(
            dimension_semantics=("arbitrary",)),   # loss reduces over the batch axis
    )(x_p, w_p, b_p, yt_p, er_p)
    return y_pad[:n, :outdim], loss[0, 0]


# --------------------------- forward only (predict) --------------------------
def _fwd_kernel(x_ref, w_ref, b_ref, y_ref):
    y = jnp.dot(x_ref[...], w_ref[...], preferred_element_type=jnp.float32)
    y_ref[...] = (y + b_ref[...]).astype(y_ref.dtype)


def mlp_forward(x, w, b, *, tm=512):
    n, indim = x.shape
    outdim = w.shape[1]
    outp = _round_up(outdim, LANE)

    tm = min(tm, _round_up(n, 8))
    n_pad = _round_up(n, tm)

    x_p = jnp.pad(x.astype(jnp.float32), ((0, n_pad - n), (0, 0)))
    w_p = jnp.pad(w.astype(jnp.float32), ((0, 0), (0, outp - outdim)))
    b_p = jnp.pad(jnp.asarray(b, jnp.float32).reshape(1, outdim),
                  ((0, 0), (0, outp - outdim)))

    y_pad = pl.pallas_call(
        _fwd_kernel,
        out_shape=jax.ShapeDtypeStruct((n_pad, outp), jnp.float32),
        grid=(n_pad // tm,),
        in_specs=[
            pl.BlockSpec((tm, indim), lambda i: (i, 0)),
            pl.BlockSpec((indim, outp), lambda i: (0, 0)),
            pl.BlockSpec((1, outp), lambda i: (0, 0)),
        ],
        out_specs=pl.BlockSpec((tm, outp), lambda i: (i, 0)),
        compiler_params=pltpu.CompilerParams(
            dimension_semantics=("parallel",)),    # no cross-tile dependency
    )(x_p, w_p, b_p)
    return y_pad[:n, :outdim]


# ----------------- standalone weighted loss (tiled grid reduction) -----------
def _wloss_kernel(n_rows, yp_ref, yt_ref, er_ref, loss_ref, acc_ref):
    i = pl.program_id(0)
    tm = yp_ref.shape[0]

    @pl.when(i == 0)
    def _init():
        acc_ref[0] = jnp.float32(0.0)

    se = (yp_ref[...] - yt_ref[...]) ** 2
    wse = jnp.sum(se * er_ref[...], axis=1, keepdims=True)
    row = jax.lax.broadcasted_iota(jnp.int32, (tm, 1), 0) + i * tm
    wse = jnp.where(row < n_rows, wse, 0.0)
    acc_ref[0] += jnp.sum(wse)

    @pl.when(i == pl.num_programs(0) - 1)
    def _finalize():
        loss_ref[0, 0] = acc_ref[0] / jnp.float32(n_rows)


def weighted_loss(y_pred, y_true, eigenratio, *, tm=512):
    n, outdim = y_pred.shape
    tm = min(tm, _round_up(n, 8))
    n_pad = _round_up(n, tm)

    yp = jnp.pad(y_pred.astype(jnp.float32), ((0, n_pad - n), (0, 0)))
    yt = jnp.pad(y_true.astype(jnp.float32), ((0, n_pad - n), (0, 0)))
    er = _prep_eigenratio(eigenratio, outdim)

    loss = pl.pallas_call(
        functools.partial(_wloss_kernel, n),
        out_shape=jax.ShapeDtypeStruct((1, 1), jnp.float32),
        grid=(n_pad // tm,),
        in_specs=[
            pl.BlockSpec((tm, outdim), lambda i: (i, 0)),
            pl.BlockSpec((tm, outdim), lambda i: (i, 0)),
            pl.BlockSpec((1, outdim), lambda i: (0, 0)),
        ],
        out_specs=pl.BlockSpec(memory_space=pltpu.MemorySpace.SMEM),
        scratch_shapes=[pltpu.SMEM((1,), jnp.float32)],
        compiler_params=pltpu.CompilerParams(
            dimension_semantics=("arbitrary",)),
    )(yp, yt, er)
    return loss[0, 0]


if __name__ == "__main__":
    key = jax.random.PRNGKey(0)
    kx, kw, kb, ky, kx2, ky2 = jax.random.split(key, 6)

    N, indim, outdim = 8, 16, 8
    x = jax.random.normal(kx, (N, indim), dtype=jnp.float32)
    w = 0.1 * jax.random.normal(kw, (indim, outdim), dtype=jnp.float32)
    b = 0.1 * jax.random.normal(kb, (1, outdim), dtype=jnp.float32)
    y_true = jax.random.normal(ky, (N, outdim), dtype=jnp.float32)
    eigenratio = jnp.linspace(1.0, 0.1, outdim, dtype=jnp.float32).reshape(1, outdim)

    # fused forward + loss
    y_pred, loss = mlp_forward_with_loss(x, w, b, y_true, eigenratio)
    # forward-only (predict path) and standalone loss
    y_fwd = mlp_forward(x, w, b)
    loss_sa = weighted_loss(y_pred, y_true, eigenratio)
    jax.block_until_ready((y_pred, loss, y_fwd, loss_sa))

    # plain-JAX reference check
    y_ref = x @ w + b
    l_ref = jnp.mean(jnp.sum(((y_ref - y_true) ** 2) * eigenratio, axis=1))
    assert jnp.allclose(y_pred, y_ref, atol=1e-5), "fused forward mismatch"
    assert jnp.allclose(y_fwd, y_ref, atol=1e-5), "forward mismatch"
    assert jnp.allclose(loss, l_ref, atol=1e-5), "fused loss mismatch"
    assert jnp.allclose(loss_sa, l_ref, atol=1e-5), "standalone loss mismatch"

    # multi-tile path with batch padding/masking (N not a multiple of the tile)
    N2 = 20
    x2 = jax.random.normal(kx2, (N2, indim), dtype=jnp.float32)
    y2_true = jax.random.normal(ky2, (N2, outdim), dtype=jnp.float32)
    y2_pred, loss2 = mlp_forward_with_loss(x2, w, b, y2_true, eigenratio, tm=8)
    jax.block_until_ready((y2_pred, loss2))
    y2_ref = x2 @ w + b
    l2_ref = jnp.mean(jnp.sum(((y2_ref - y2_true) ** 2) * eigenratio, axis=1))
    assert jnp.allclose(y2_pred, y2_ref, atol=1e-5), "tiled forward mismatch"
    assert jnp.allclose(loss2, l2_ref, atol=1e-5), "tiled loss mismatch"

    # scalar eigenratio path (eigenratio=1.0 default in fit())
    y3_pred, loss3 = mlp_forward_with_loss(x, w, b, y_true, 1.0)
    jax.block_until_ready((y3_pred, loss3))
    l3_ref = jnp.mean(jnp.sum((y_ref - y_true) ** 2, axis=1))
    assert jnp.allclose(loss3, l3_ref, atol=1e-5), "scalar-eigenratio loss mismatch"

    print("KERNEL_OK")
</pallas_src>

<mosaic_0001>
module attributes {stable_mosaic.version = 11 : i64} {
  func.func @_fused_fwd_loss_kernel(%arg0: i32, %arg1: memref<8x16xf32, #tpu.memory_space<vmem>>, %arg2: memref<16x128xf32, #tpu.memory_space<vmem>>, %arg3: memref<1x128xf32, #tpu.memory_space<vmem>>, %arg4: memref<8x128xf32, #tpu.memory_space<vmem>>, %arg5: memref<1x128xf32, #tpu.memory_space<vmem>>, %arg6: memref<8x128xf32, #tpu.memory_space<vmem>>, %arg7: memref<1x1xf32, #tpu.memory_space<smem>>, %arg8: memref<1xf32, #tpu.memory_space<smem>>) attributes {dimension_semantics = [#tpu.dimension_semantics<arbitrary>], iteration_bounds = array<i64: 1>, scalar_prefetch = 0 : i64, scratch_operands = 1 : i64, tpu.core_type = #tpu.core_type<tc>, window_params = [{transform_indices = @transform_0, window_bounds = array<i64: 8, 16>}, {pipeline_mode = #tpu.pipeline_mode<synchronous>, transform_indices = @transform_1, window_bounds = array<i64: 16, 128>}, {pipeline_mode = #tpu.pipeline_mode<synchronous>, transform_indices = @transform_2, window_bounds = array<i64: 1, 128>}, {transform_indices = @transform_3, window_bounds = array<i64: 8, 128>}, {pipeline_mode = #tpu.pipeline_mode<synchronous>, transform_indices = @transform_4, window_bounds = array<i64: 1, 128>}, {transform_indices = @transform_5, window_bounds = array<i64: 8, 128>}, {transform_indices = @transform_6, window_bounds = array<i64: 1, 1>}]} {
    %c0_i32 = arith.constant 0 : i32
    %0 = arith.cmpi eq, %arg0, %c0_i32 : i32
    %1 = arith.extui %0 : i1 to i32
    %c0_i32_0 = arith.constant 0 : i32
    %2 = arith.cmpi ne, %1, %c0_i32_0 : i32
    scf.if %2 {
      %cst_20 = arith.constant 0.000000e+00 : f32
      %c0_21 = arith.constant 0 : index
      %36 = memref.load %arg8[%c0_21] : memref<1xf32, #tpu.memory_space<smem>>
      memref.store %cst_20, %arg8[%c0_21] : memref<1xf32, #tpu.memory_space<smem>>
    } else {
    }
    %c0 = arith.constant 0 : index
    %c0_1 = arith.constant 0 : index
    %3 = vector.load %arg1[%c0, %c0_1] : memref<8x16xf32, #tpu.memory_space<vmem>>, vector<8x16xf32>
    %c0_2 = arith.constant 0 : index
    %c0_3 = arith.constant 0 : index
    %4 = vector.load %arg2[%c0_2, %c0_3] : memref<16x128xf32, #tpu.memory_space<vmem>>, vector<16x128xf32>
    %cst = arith.constant dense<0.000000e+00> : vector<8x128xf32>
    %5 = tpu.matmul %3, %4, %cst {dimension_numbers = #tpu.dot_dimension_numbers<[1], [0], [0], [1], [0, 0, 1, 1], [], []>} : vector<8x16xf32>, vector<16x128xf32>, vector<8x128xf32> -> vector<8x128xf32>
    %c0_4 = arith.constant 0 : index
    %c0_5 = arith.constant 0 : index
    %6 = vector.load %arg3[%c0_4, %c0_5] : memref<1x128xf32, #tpu.memory_space<vmem>>, vector<1x128xf32>
    %7 = vector.broadcast %6 : vector<1x128xf32> to vector<8x128xf32>
    %8 = arith.addf %5, %7 : vector<8x128xf32>
    %c0_6 = arith.constant 0 : index
    %c0_7 = arith.constant 0 : index
    %9 = vector.load %arg6[%c0_6, %c0_7] : memref<8x128xf32, #tpu.memory_space<vmem>>, vector<8x128xf32>
    tpu.vector_store %arg6[%c0_6, %c0_7], %8 {strides = array<i32>} : memref<8x128xf32, #tpu.memory_space<vmem>>, vector<8x128xf32>,
    %c0_8 = arith.constant 0 : index
    %c0_9 = arith.constant 0 : index
    %10 = vector.load %arg4[%c0_8, %c0_9] : memref<8x128xf32, #tpu.memory_space<vmem>>, vector<8x128xf32>
    %11 = arith.subf %8, %10 : vector<8x128xf32>
    %12 = arith.mulf %11, %11 : vector<8x128xf32>
    %c0_10 = arith.constant 0 : index
    %c0_11 = arith.constant 0 : index
    %13 = vector.load %arg5[%c0_10, %c0_11] : memref<1x128xf32, #tpu.memory_space<vmem>>, vector<1x128xf32>
    %14 = vector.broadcast %13 : vector<1x128xf32> to vector<8x128xf32>
    %15 = arith.mulf %12, %14 : vector<8x128xf32>
    %cst_12 = arith.constant dense<0.000000e+00> : vector<8xf32>
    %16 = vector.multi_reduction <add>, %15, %cst_12 [1] : vector<8x128xf32> to vector<8xf32>
    %17 = vector.shape_cast %16 : vector<8xf32> to vector<8x1xf32>
    %18 = tpu.iota {dimensions = array<i32: 0>} : vector<8x1xi32>
    %c8_i32 = arith.constant 8 : i32
    %19 = arith.muli %arg0, %c8_i32 : i32
    %20 = vector.broadcast %19 : i32 to vector<8x1xi32>
    %21 = arith.addi %18, %20 : vector<8x1xi32>
    %c8_i32_13 = arith.constant 8 : i32
    %22 = vector.broadcast %c8_i32_13 : i32 to vector<8x1xi32>
    %23 = arith.cmpi slt, %21, %22 : vector<8x1xi32>
    %cst_14 = arith.constant 0.000000e+00 : f32
    %24 = vector.broadcast %cst_14 : f32 to vector<8x1xf32>
    %25 = arith.select %23, %17, %24 : vector<8x1xi1>, vector<8x1xf32>
    %c0_15 = arith.constant 0 : index
    %26 = memref.load %arg8[%c0_15] : memref<1xf32, #tpu.memory_space<smem>>
    %27 = vector.shape_cast %25 : vector<8x1xf32> to vector<1x8x1xf32>
    %cst_16 = arith.constant dense<0.000000e+00> : vector<1xf32>
    %28 = vector.multi_reduction <add>, %27, %cst_16 [1, 2] : vector<1x8x1xf32> to vector<1xf32>
    %29 = vector.shape_cast %28 : vector<1xf32> to vector<1x1x1xf32>
    %30 = vector.extract %29[0, 0, 0] : f32 from vector<1x1x1xf32>
    %31 = arith.addf %26, %30 : f32
    %c0_17 = arith.constant 0 : index
    %32 = memref.load %arg8[%c0_17] : memref<1xf32, #tpu.memory_space<smem>>
    memref.store %31, %arg8[%c0_17] : memref<1xf32, #tpu.memory_space<smem>>
    %c0_i32_18 = arith.constant 0 : i32
    %33 = arith.cmpi eq, %arg0, %c0_i32_18 : i32
    %34 = arith.extui %33 : i1 to i32
    %c0_i32_19 = arith.constant 0 : i32
    %35 = arith.cmpi ne, %34, %c0_i32_19 : i32
    scf.if %35 {
      %c0_20 = arith.constant 0 : index
      %36 = memref.load %arg8[%c0_20] : memref<1xf32, #tpu.memory_space<smem>>
      %cst_21 = arith.constant 8.000000e+00 : f32
      %37 = arith.divf %36, %cst_21 : f32
      %c0_22 = arith.constant 0 : index
      %c0_23 = arith.constant 0 : index
      %38 = memref.load %arg7[%c0_22, %c0_23] : memref<1x1xf32, #tpu.memory_space<smem>>
      memref.store %37, %arg7[%c0_22, %c0_23] : memref<1x1xf32, #tpu.memory_space<smem>>
    } else {
    }
    return
  }
  func.func @transform_0(%arg0: i32) -> (i32, i32) {
    %c0_i32 = arith.constant 0 : i32
    %c0_i32_0 = arith.constant 0 : i32
    return %arg0, %c0_i32 : i32, i32
  }
  func.func @transform_1(%arg0: i32) -> (i32, i32) {
    %c0_i32 = arith.constant 0 : i32
    %c0_i32_0 = arith.constant 0 : i32
    %c0_i32_1 = arith.constant 0 : i32
    return %c0_i32, %c0_i32_0 : i32, i32
  }
  func.func @transform_2(%arg0: i32) -> (i32, i32) {
    %c0_i32 = arith.constant 0 : i32
    %c0_i32_0 = arith.constant 0 : i32
    %c0_i32_1 = arith.constant 0 : i32
    return %c0_i32, %c0_i32_0 : i32, i32
  }
  func.func @transform_3(%arg0: i32) -> (i32, i32) {
    %c0_i32 = arith.constant 0 : i32
    %c0_i32_0 = arith.constant 0 : i32
    return %arg0, %c0_i32 : i32, i32
  }
  func.func @transform_4(%arg0: i32) -> (i32, i32) {
    %c0_i32 = arith.constant 0 : i32
    %c0_i32_0 = arith.constant 0 : i32
    %c0_i32_1 = arith.constant 0 : i32
    return %c0_i32, %c0_i32_0 : i32, i32
  }
  func.func @transform_5(%arg0: i32) -> (i32, i32) {
    %c0_i32 = arith.constant 0 : i32
    %c0_i32_0 = arith.constant 0 : i32
    return %arg0, %c0_i32 : i32, i32
  }
  func.func @transform_6(%arg0: i32) -> (i32, i32) {
    %c0_i32 = arith.constant 0 : i32
    %c0_i32_0 = arith.constant 0 : i32
    %c0_i32_1 = arith.constant 0 : i32
    return %c0_i32, %c0_i32_0 : i32, i32
  }
}

</mosaic_0001>

<llo_original>
// kernel: tpu_custom_call.1
$region0: #{tpu_custom_call.1}
  #allocation0 [shape = 'u32[]', space=smem, size = 0x4, offset = 0x4, fixed_abs, tag = 'smem constant byte address 0x4 - core index']
  #allocation1 [shape = 'u32[144,128]{1,0:T(1,128)}', space=vmem, size = 0x12000, scoped, tag = 'internal scratch']
  #allocation2 [shape = 'f32[1]{0:T(128)}', space=smem, size = 0x200, scoped, tag = 'scratch operand']
  %s0 = inlined_call_operand.hbm [shape: f32[8,16], index: 0, kind: input, shape index: {}]
  %s1 = inlined_call_operand.hbm [shape: f32[16,128], index: 1, kind: input, shape index: {}]
  %s2 = inlined_call_operand.vmem [shape: f32[1,128], index: 2, kind: input, shape index: {}]
  %s3 = inlined_call_operand.hbm [shape: f32[8,128], index: 3, kind: input, shape index: {}]
  %s4 = inlined_call_operand.vmem [shape: f32[1,128], index: 4, kind: input, shape index: {}]
  %s5 = inlined_call_operand.hbm [shape: f32[8,128], index: 5, kind: output, shape index: {0}]
  %s6 = inlined_call_operand.hbm [shape: f32[1,1], index: 6, kind: output, shape index: {1}]
  %7 = xla_tuple %s5, %s6
  %s8 = sld [smem:[#allocation0]]
  $region58: #{tpu_custom_call.1} parent=0
    _
  %s10 = ssub.s32 1, %s8
  %s11 = scalar_select 0, %s10, %s8
  $region1: #{tpu_custom_call.1} parent=0
    #allocation3 [shape = 'u8[4096]{0}', space=vmem, size = 0x1000, scoped, tag = 'input window, operand 0, single buffered']
    #allocation4 [shape = 's32[1]{0}', space=sflag, size = 0x4, scoped, tag = 'scoped memory for tpu_custom_call.1']
    #allocation5 [shape = 's32[1]{0}', space=sflag, size = 0x4, scoped, tag = 'scoped memory for tpu_custom_call.1']
    #allocation6 [shape = 's32[1]{0}', space=sflag, size = 0x4, scoped, tag = 'scoped memory for tpu_custom_call.1']
    #allocation7 [shape = 'u8[8192]{0}', space=vmem, size = 0x2000, scoped, tag = 'input window, operand 1, single buffered']
    #allocation8 [shape = 's32[1]{0}', space=sflag, size = 0x4, scoped, tag = 'scoped memory for tpu_custom_call.1']
    #allocation9 [shape = 'u8[4096]{0}', space=vmem, size = 0x1000, scoped, tag = 'input window, operand 3, single buffered']
    #allocation10 [shape = 'u8[4096]{0}', space=vmem, size = 0x1000, scoped, tag = 'output window, operand 0, single buffered']
    #allocation11 [shape = 'u8[512]{0}', space=smem, size = 0x200, scoped, tag = 'output window, operand 1, single buffered']
    %12 = vsyncpa [#allocation4], 0
    %13 = vsyncpa [#allocation8], 0
    %14 = vsyncpa [#allocation5], 0
    %15 = vsyncpa [#allocation6], 0
    // Predicated region
    $region2: #{tpu_custom_call.1} parent=1 // pred_check
      _
    $region3: #{tpu_custom_call.1} parent=1 // pred_check_branch
      %17 = sbr.rel (0) target = $region5
    $region4: #{tpu_custom_call.1} parent=1 // pred_region
      %s19 = ssub.s32 128, 128
      %20 = vsyncadd [#allocation4], %s19
      %s22 = sshll.u32 [#allocation3], 4
      %s23 = int_to_ptr.vmem [resolvable:$true] %s22
      %25 = dma.hbm_to_vmem [thread:$0]  %s0, 128, %s23, [#allocation4]
    $region5: #{tpu_custom_call.1} parent=1 // pred_fallthru
      _
    // Predicated region
    $region6: #{tpu_custom_call.1} parent=1 // pred_check
      _
    $region7: #{tpu_custom_call.1} parent=1 // pred_check_branch
      %27 = sbr.rel (0) target = $region9
    $region8: #{tpu_custom_call.1} parent=1 // pred_region
      %s29 = ssub.s32 256, 256
      %30 = vsyncadd [#allocation8], %s29
      %s31 = sshll.u32 [#allocation7], 4
      %s32 = int_to_ptr.vmem [resolvable:$true] %s31
      %37 = dma.hbm_to_vmem [thread:$0]  %s1, 256, %s32, [#allocation8], 128, 128, 8
    $region9: #{tpu_custom_call.1} parent=1 // pred_fallthru
      _
    // Predicated region
    $region10: #{tpu_custom_call.1} parent=1 // pred_check
      _
    $region11: #{tpu_custom_call.1} parent=1 // pred_check_branch
      %39 = sbr.rel (0) target = $region13
    $region12: #{tpu_custom_call.1} parent=1 // pred_region
      _
    $region13: #{tpu_custom_call.1} parent=1 // pred_fallthru
      _
    // Predicated region
    $region14: #{tpu_custom_call.1} parent=1 // pred_check
      _
    $region15: #{tpu_custom_call.1} parent=1 // pred_check_branch
      %41 = sbr.rel (0) target = $region17
    $region16: #{tpu_custom_call.1} parent=1 // pred_region
      %s43 = ssub.s32 128, 128
      %44 = vsyncadd [#allocation8], %s43
      %s46 = sshll.u32 [#allocation9], 4
      %s47 = int_to_ptr.vmem [resolvable:$true] %s46
      %49 = dma.hbm_to_vmem [thread:$0]  %s3, 128, %s47, [#allocation8]
    $region17: #{tpu_custom_call.1} parent=1 // pred_fallthru
      _
    // Predicated region
    $region18: #{tpu_custom_call.1} parent=1 // pred_check
      _
    $region19: #{tpu_custom_call.1} parent=1 // pred_check_branch
      %51 = sbr.rel (0) target = $region21
    $region20: #{tpu_custom_call.1} parent=1 // pred_region
      _
    $region21: #{tpu_custom_call.1} parent=1 // pred_fallthru
      _
    // Predicated region
    $region22: #{tpu_custom_call.1} parent=1 // pred_check
      _
    $region23: #{tpu_custom_call.1} parent=1 // pred_check_branch
      %53 = sbr.rel (0) target = $region25
    $region24: #{tpu_custom_call.1} parent=1 // pred_region
      %54 = dma.done [#allocation4], 128
    $region25: #{tpu_custom_call.1} parent=1 // pred_fallthru
      _
    // Predicated region
    $region26: #{tpu_custom_call.1} parent=1 // pred_check
      _
    $region27: #{tpu_custom_call.1} parent=1 // pred_check_branch
      %56 = sbr.rel (0) target = $region29
    $region28: #{tpu_custom_call.1} parent=1 // pred_region
      %57 = dma.done [#allocation8], 256
    $region29: #{tpu_custom_call.1} parent=1 // pred_fallthru
      _
    // Predicated region
    $region30: #{tpu_custom_call.1} parent=1 // pred_check
      _
    $region31: #{tpu_custom_call.1} parent=1 // pred_check_branch
      %59 = sbr.rel (0) target = $region33
    $region32: #{tpu_custom_call.1} parent=1 // pred_region
      %60 = dma.done [#allocation8], 128
    $region33: #{tpu_custom_call.1} parent=1 // pred_fallthru
      _
    %p61 = scmp.eq.s32.totalorder 0, 0
    // Predicated region
    $region34: #{tpu_custom_call.1} parent=1 // pred_check
      %p62 = pneg %p61
    $region35: #{tpu_custom_call.1} parent=1 // pred_check_branch
      %64 = sbr.rel (%p62) target = $region37
    $region36: #{tpu_custom_call.1} parent=1 // pred_region
      %s65 = scalar_lea.smem [#allocation2], 0
      %66 = sst [smem:[%s65]] 0.0
    $region37: #{tpu_custom_call.1} parent=1 // pred_fallthru
      _
    %v67 = vld [vmem:[#allocation3] sm:$0xff]
    %v68 = vld [vmem:[#allocation7] sm:$0xff]
    %v69 = vld [vmem:[#allocation7 + $0x8] sm:$0xff]
    %v70 = vld [vmem:[%s2] sm:$0x1]
    %v72 = vlaneseq
    %v73 = vshrl.u32 %v72, 7
    %v74 = vsub.s32 0, %v73
    %v75 = vrot.slane %v70, %v74
    %vm77 = vcmask 130048
    %v79 = vsel %vm77, %v67, 0
    %81 = vmatprep.subr.mxu0 0.0
    %82 = vmatpush1.msra.mxu0 0.0
    %83 = vmatprep.subr.mxu0 0.0
    %84 = vmatpush1.msra.mxu0 0.0
    %85 = vmatprep.subr.mxu0 0.0
    %86 = vmatpush1.msra.mxu0 0.0
    %87 = vmatprep.subr.mxu0 0.0
    %88 = vmatpush1.msra.mxu0 0.0
    %89 = vmatprep.subr.mxu0 0.0
    %90 = vmatpush1.msra.mxu0 0.0
    %91 = vmatprep.subr.mxu0 0.0
    %92 = vmatpush1.msra.mxu0 0.0
    %93 = vmatprep.subr.mxu0 0.0
    %94 = vmatpush1.msra.mxu0 0.0
    %95 = vmatprep.subr.mxu0 0.0
    %96 = vmatpush1.msra.mxu0 0.0
    %97 = vmatprep.subr.mxu0 0.0
    %98 = vmatpush1.msra.mxu0 0.0
    %99 = vmatprep.subr.mxu0 0.0
    %100 = vmatpush1.msra.mxu0 0.0
    %101 = vmatprep.subr.mxu0 0.0
    %102 = vmatpush1.msra.mxu0 0.0
    %103 = vmatprep.subr.mxu0 0.0
    %104 = vmatpush1.msra.mxu0 0.0
    %105 = vmatprep.subr.mxu0 0.0
    %106 = vmatpush1.msra.mxu0 0.0
    %107 = vmatprep.subr.mxu0 0.0
    %108 = vmatpush1.msra.mxu0 0.0
    %109 = vmatprep.subr.mxu0 0.0
    %110 = vmatpush1.msra.mxu0 %v69
    %111 = vmatprep.subr.mxu0 0.0
    %112 = vmatpush1.msra.mxu0 %v68
    %113 = vmatprep.subr.mxu0 0.0
    %114 = vmatpush2.msra.mxu0 0.0
    %115 = vmatprep.subr.mxu0 0.0
    %116 = vmatpush2.msra.mxu0 0.0
    %117 = vmatprep.subr.mxu0 0.0
    %118 = vmatpush2.msra.mxu0 0.0
    %119 = vmatprep.subr.mxu0 0.0
    %120 = vmatpush2.msra.mxu0 0.0
    %121 = vmatprep.subr.mxu0 0.0
    %122 = vmatpush2.msra.mxu0 0.0
    %123 = vmatprep.subr.mxu0 0.0
    %124 = vmatpush2.msra.mxu0 0.0
    %125 = vmatprep.subr.mxu0 0.0
    %126 = vmatpush2.msra.mxu0 0.0
    %127 = vmatprep.subr.mxu0 0.0
    %128 = vmatpush2.msra.mxu0 0.0
    %129 = vmatprep.subr.mxu0 0.0
    %130 = vmatpush2.msra.mxu0 0.0
    %131 = vmatprep.subr.mxu0 0.0
    %132 = vmatpush2.msra.mxu0 0.0
    %133 = vmatprep.subr.mxu0 0.0
    %134 = vmatpush2.msra.mxu0 0.0
    %135 = vmatprep.subr.mxu0 0.0
    %136 = vmatpush2.msra.mxu0 0.0
    %137 = vmatprep.subr.mxu0 0.0
    %138 = vmatpush2.msra.mxu0 0.0
    %139 = vmatprep.subr.mxu0 0.0
    %140 = vmatpush2.msra.mxu0 0.0
    %141 = vmatprep.subr.mxu0 0.0
    %142 = vmatpush2.msra.mxu0 0.0
    %143 = vmatprep.subr.mxu0 0.0
    %144 = vmatpush2.msra.mxu0 0.0
    %145 = vmatprep.mubr.f32.mxu0 0.0
    %146 = vmatmul.mubr.f32.gmra.mxu0 %v79
    %v147 = vpop.f32.mrf.mxu0
    %v148 = vadd.f32 %v75, %v147
    %v149 = vpop.f32.mrf.mxu0
    %150 = vdwg.mxu0
    %151 = vst [vmem:[#allocation10] sm:$0xff] %v148
    %v152 = vld [vmem:[#allocation9] sm:$0xff]
    %v153 = vsub.f32 %v148, %v152
    %v154 = vmul.f32 %v153, %v153
    %v155 = vld [vmem:[%s4] sm:$0x1]
    %v157 = vlaneseq
    %v158 = vshrl.u32 %v157, 7
    %v159 = vsub.s32 0, %v158
    %v160 = vrot.slane %v155, %v159
    %v162 = vmul.f32 %v154, %v160
    %163 = vadd.xlane.f32.xlu0 %v162
    %v164 = vpop.xlane.xlu0 %163
    %v165 = vlaneseq
    %v166 = vshrl.u32 %v165, 7
    %s167 = smul.u32 0, 8
    %v168 = vstv %s167
    %v169 = vadd.s32 %v166, %v168
    %vm170 = vcmp.lt.s32.totalorder %v169, 8
    %v171 = vsel %vm170, %v164, 0.0
    %s172 = sld [smem:[#allocation2]]
    %vm173 = vcmask 7168
    %v174 = vsel %vm173, %v171, 0.0
    %175 = vadd.xlane.f32.xlu0 %v174
    %v176 = vpop.xlane.xlu0 %175
    %v177 = vrot.slane %v176, 4
    %v178 = vadd.f32 %v176, %v177
    %v179 = vrot.slane %v178, 2
    %v180 = vadd.f32 %v178, %v179
    %v181 = vrot.slane %v180, 1
    %v182 = vadd.f32 %v180, %v181
    %s183 = vtos %v182
    %s184 = sadd.f32 %s172, %s183
    %s185 = scalar_lea.smem [#allocation2], 0
    %186 = sst [smem:[%s185]] %s184
    // Predicated region
    $region38: #{tpu_custom_call.1} parent=1 // pred_check
      %p187 = pneg %p61
    $region39: #{tpu_custom_call.1} parent=1 // pred_check_branch
      %189 = sbr.rel (%p187) target = $region41
    $region40: #{tpu_custom_call.1} parent=1 // pred_region
      %s190 = sld [smem:[#allocation2]]
      %v191 = vrcp.pop 8.0
      %s192 = vtos %v191
      %s193 = smul.f32 %s190, %s192
      %s194 = scalar_lea.smem [#allocation11], 0
      %195 = sst [smem:[%s194]] %s193
    $region41: #{tpu_custom_call.1} parent=1 // pred_fallthru
      _
    // Predicated region
    $region42: #{tpu_custom_call.1} parent=1 // pred_check
      _
    $region43: #{tpu_custom_call.1} parent=1 // pred_check_branch
      %197 = sbr.rel (0) target = $region45
    $region44: #{tpu_custom_call.1} parent=1 // pred_region
      %s199 = ssub.s32 128, 128
      %200 = vsyncadd [#allocation5], %s199
      %s202 = sshll.u32 [#allocation10], 4
      %s203 = int_to_ptr.vmem [resolvable:$true] %s202
      %205 = dma.vmem_to_hbm [thread:$0]  %s203, 128, %s5, [#allocation5]
    $region45: #{tpu_custom_call.1} parent=1 // pred_fallthru
      _
    // Predicated region
    $region46: #{tpu_custom_call.1} parent=1 // pred_check
      _
    $region47: #{tpu_custom_call.1} parent=1 // pred_check_branch
      %207 = sbr.rel (0) target = $region49
    $region48: #{tpu_custom_call.1} parent=1 // pred_region
      %s209 = ssub.s32 16, 16
      %210 = vsyncadd [#allocation6], %s209
      %213 = dma.smem_to_hbm [#allocation11], 16, %s6, [#allocation6]
    $region49: #{tpu_custom_call.1} parent=1 // pred_fallthru
      _
    // Predicated region
    $region50: #{tpu_custom_call.1} parent=1 // pred_check
      _
    $region51: #{tpu_custom_call.1} parent=1 // pred_check_branch
      %215 = sbr.rel (0) target = $region53
    $region52: #{tpu_custom_call.1} parent=1 // pred_region
      %216 = dma.done [#allocation5], 128
    $region53: #{tpu_custom_call.1} parent=1 // pred_fallthru
      _
    // Predicated region
    $region54: #{tpu_custom_call.1} parent=1 // pred_check
      _
    $region55: #{tpu_custom_call.1} parent=1 // pred_check_branch
      %218 = sbr.rel (0) target = $region57
    $region56: #{tpu_custom_call.1} parent=1 // pred_region
      %219 = dma.done [#allocation6], 16
    $region57: #{tpu_custom_call.1} parent=1 // pred_fallthru
      _
    %220 = sfence
    %221 = vsyncpa [#allocation4], 1
    %222 = vsyncpa [#allocation8], 1
    %223 = vsyncpa [#allocation5], 1
    %224 = vsyncpa [#allocation6], 1

</llo_original>
